<compile_context>
chip_gen: v5e
topology: v5e:2x2
jax: 0.10.0
libtpu: 0.0.40
codegen_flags: <defaults>
</compile_context>

<pallas_src>
import math
from functools import partial

import jax
import jax.numpy as jnp
from jax.experimental import pallas as pl
from jax.experimental.pallas import tpu as pltpu


def _fused_mha_kernel(x_ref, wqkv_ref, wcomb_ref, bcomb_ref, o_ref, *,
                      head_size, num_heads, flash_rows, sub_blocks):
    # x_ref:     (B, R, E)        R = sub_blocks * flash_rows rows of the sequence
    # wqkv_ref:  (E, 3*NH*H)      stacked QKV weights, [Q h0..h_{NH-1} | K ... | V ...]
    # wcomb_ref: (NH*H, E)        out_proj folded into final proj
    # bcomb_ref: (1, E)           folded bias
    # o_ref:     (B, R, E)        final module output for this seq slab (lane-dense)
    H = head_size
    NH = num_heads
    NHH = NH * H

    x = x_ref[...]                       # keep input dtype for MXU operands
    compute_dtype = x.dtype

    # One fused QKV matmul for all heads.
    qkv = jnp.einsum("bre,ef->brf", x, wqkv_ref[...],
                     preferred_element_type=jnp.float32)
    q_all = qkv[..., 0 * NHH:1 * NHH].astype(compute_dtype)
    k_all = qkv[..., 1 * NHH:2 * NHH].astype(compute_dtype)
    v_all = qkv[..., 2 * NHH:3 * NHH].astype(compute_dtype)

    scale = 1.0 / math.sqrt(H)
    wc = wcomb_ref[...]
    bc = bcomb_ref[...]

    # `sub_blocks` independent block-local attentions per grid step (statically
    # unrolled; each flash block only attends within itself, matching the
    # PyTorch flash_attention tiling).
    for j in range(sub_blocks):
        r0 = j * flash_rows
        heads = []
        for h in range(NH):
            c0 = h * H
            qh = q_all[:, r0:r0 + flash_rows, c0:c0 + H]
            kh = k_all[:, r0:r0 + flash_rows, c0:c0 + H]
            vh = v_all[:, r0:r0 + flash_rows, c0:c0 + H]

            s = jnp.einsum("bqd,bkd->bqk", qh, kh,
                           preferred_element_type=jnp.float32) * scale
            # TODO(synk): optional attention-mask / decoder-tril path (mask is None here).
            s = s - jnp.max(s, axis=-1, keepdims=True)
            p = jnp.exp(s)
            denom = jnp.sum(p, axis=-1, keepdims=True) + 1e-6
            p = p * pl.reciprocal(denom, approx=True)     # EUP slot; frees the VPU divide

            heads.append(jnp.einsum("bqk,bkd->bqd", p.astype(compute_dtype), vh,
                                    preferred_element_type=jnp.float32))

        # concat heads -> (B, flash_rows, NH*H), then single folded projection -> (B, flash_rows, E)
        attn_cat = jnp.concatenate(heads, axis=-1)
        y = jnp.einsum("bqf,fe->bqe", attn_cat.astype(compute_dtype), wc,
                       preferred_element_type=jnp.float32)
        o_ref[:, r0:r0 + flash_rows, :] = (y + bc).astype(o_ref.dtype)


def multi_head_attention(x, params, *, head_size, num_heads,
                         flash_block_size=128, rows_per_step=None):
    B, S, E = x.shape
    H, NH = head_size, num_heads

    fr = min(flash_block_size, S)               # flash block size actually used
    assert S % fr == 0, "seq_len must be a multiple of the flash block size"
    n_flash = S // fr

    # How many flash blocks each grid step handles (amortizes ~600-cycle/step
    # overhead; keep the double-buffered slab a few hundred rows, well under
    # the 32 MiB scoped-VMEM default -- re-derive for v7x's smaller VMEM).
    if rows_per_step is None:
        sub = max(1, min(n_flash, 512 // fr)) if fr < 512 else 1
    else:
        sub = max(1, min(n_flash, max(1, rows_per_step // fr)))
    while n_flash % sub:
        sub -= 1
    R = sub * fr
    num_steps = n_flash // sub

    # ---- trace-time weight preparation (one-off, outside the kernel) --------
    # Stack per-head QKV weights -> (E, 3*NH*H): [Q heads | K heads | V heads].
    wqkv = params["wqkv"].reshape(NH, E, 3, H)              # (NH, E, 3, H)
    wqkv_stacked = jnp.transpose(wqkv, (1, 2, 0, 3)).reshape(E, 3 * NH * H)
    # Fold per-head out_proj into the final projection.
    wproj_h = params["wproj"].reshape(NH, H, E)             # (NH, H, E)
    w_comb = jnp.einsum("hij,hje->hie", params["wout"], wproj_h).reshape(NH * H, E)
    b_comb = (jnp.einsum("hj,hje->e", params["bout"], wproj_h)
              + params["bproj"]).reshape(1, E)

    kernel = partial(_fused_mha_kernel, head_size=H, num_heads=NH,
                     flash_rows=fr, sub_blocks=sub)

    out = pl.pallas_call(
        kernel,
        out_shape=jax.ShapeDtypeStruct((B, S, E), x.dtype),
        grid_spec=pltpu.PrefetchScalarGridSpec(
            num_scalar_prefetch=0,
            grid=(num_steps,),
            in_specs=[
                pl.BlockSpec((B, R, E), lambda i: (0, i, 0)),
                # Constant block indices: weights DMA'd once and stay resident.
                pl.BlockSpec((E, 3 * NH * H), lambda i: (0, 0)),
                pl.BlockSpec((NH * H, E), lambda i: (0, 0)),
                pl.BlockSpec((1, E), lambda i: (0, 0)),
            ],
            out_specs=pl.BlockSpec((B, R, E), lambda i: (0, i, 0)),
        ),
        compiler_params=pltpu.CompilerParams(
            dimension_semantics=("parallel",)),
    )(x, wqkv_stacked, w_comb, b_comb)

    # nn.Dropout(0.2) -> identity (eval-mode forward).
    # TODO(synk): training-mode dropout not implemented.
    return out


def multi_head_attention_ref(x, params, *, head_size, num_heads, flash_block_size=128):
    """Pure-JAX reference mirroring the PyTorch forward (eval mode) exactly."""
    B, S, E = x.shape
    H = head_size
    heads = []
    for h in range(num_heads):
        qkv = x @ params["wqkv"][h]
        q, k, v = qkv[..., :H], qkv[..., H:2 * H], qkv[..., 2 * H:]
        outs = []
        for i in range(0, S, flash_block_size):
            qb = q[:, i:i + flash_block_size]
            kb = k[:, i:i + flash_block_size]
            vb = v[:, i:i + flash_block_size]
            s = jnp.einsum("bqd,bkd->bqk", qb, kb) / math.sqrt(H)
            s = s - s.max(axis=-1, keepdims=True)
            s = jnp.exp(s)
            s = s / (s.sum(axis=-1, keepdims=True) + 1e-6)
            outs.append(jnp.einsum("bqk,bkd->bqd", s, vb))
        o = jnp.concatenate(outs, axis=1)
        o = o @ params["wout"][h] + params["bout"][h]
        heads.append(o)
    cat = jnp.concatenate(heads, axis=-1)
    return cat @ params["wproj"] + params["bproj"]


def init_params(key, *, embedding_size, head_size, num_heads):
    ks = jax.random.split(key, 5)
    scale = 0.02
    return {
        # per-head QKV projection (bias=False), stored (in, out)
        "wqkv": scale * jax.random.normal(
            ks[0], (num_heads, embedding_size, 3 * head_size), jnp.float32),
        # per-head out_proj Linear(H, H) with bias, stored (in, out)
        "wout": scale * jax.random.normal(
            ks[1], (num_heads, head_size, head_size), jnp.float32),
        "bout": scale * jax.random.normal(
            ks[2], (num_heads, head_size), jnp.float32),
        # final proj Linear(NH*H, E) with bias, stored (in, out)
        "wproj": scale * jax.random.normal(
            ks[3], (num_heads * head_size, embedding_size), jnp.float32),
        "bproj": scale * jax.random.normal(
            ks[4], (embedding_size,), jnp.float32),
    }


if __name__ == "__main__":
    embedding_size = 32
    head_size = 16
    num_heads = 4
    batch = 2
    seq = 8            # context/block_size for the module; seq <= 128 => one flash block

    key = jax.random.PRNGKey(0)
    k_param, k_x = jax.random.split(key)
    params = init_params(k_param, embedding_size=embedding_size,
                         head_size=head_size, num_heads=num_heads)
    x = jax.random.normal(k_x, (batch, seq, embedding_size), jnp.float32)

    out = multi_head_attention(x, params, head_size=head_size, num_heads=num_heads)
    out = jax.block_until_ready(out)

    ref = multi_head_attention_ref(x, params, head_size=head_size, num_heads=num_heads)
    assert out.shape == (batch, seq, embedding_size)
    # Tolerance leaves headroom for the EUP approx-reciprocal in the softmax
    # denominator and the trace-time out_proj/proj weight fold.
    assert jnp.allclose(out, ref, atol=2e-4, rtol=2e-4), "mismatch vs JAX reference"

    print("KERNEL_OK")
</pallas_src>

<mosaic_0001>
module attributes {stable_mosaic.version = 11 : i64} {
  func.func @_fused_mha_kernel(%arg0: i32, %arg1: memref<2x8x32xf32, #tpu.memory_space<vmem>>, %arg2: memref<32x192xf32, #tpu.memory_space<vmem>>, %arg3: memref<64x32xf32, #tpu.memory_space<vmem>>, %arg4: memref<1x32xf32, #tpu.memory_space<vmem>>, %arg5: memref<2x8x32xf32, #tpu.memory_space<vmem>>) attributes {dimension_semantics = [#tpu.dimension_semantics<parallel>], iteration_bounds = array<i64: 1>, scalar_prefetch = 0 : i64, scratch_operands = 0 : i64, tpu.core_type = #tpu.core_type<tc>, window_params = [{transform_indices = @transform_0, window_bounds = array<i64: 2, 8, 32>}, {pipeline_mode = #tpu.pipeline_mode<synchronous>, transform_indices = @transform_1, window_bounds = array<i64: 32, 192>}, {pipeline_mode = #tpu.pipeline_mode<synchronous>, transform_indices = @transform_2, window_bounds = array<i64: 64, 32>}, {pipeline_mode = #tpu.pipeline_mode<synchronous>, transform_indices = @transform_3, window_bounds = array<i64: 1, 32>}, {transform_indices = @transform_4, window_bounds = array<i64: 2, 8, 32>}]} {
    %c0 = arith.constant 0 : index
    %c0_0 = arith.constant 0 : index
    %c0_1 = arith.constant 0 : index
    %0 = vector.load %arg1[%c0, %c0_0, %c0_1] : memref<2x8x32xf32, #tpu.memory_space<vmem>>, vector<2x8x32xf32>
    %c0_2 = arith.constant 0 : index
    %c0_3 = arith.constant 0 : index
    %1 = vector.load %arg2[%c0_2, %c0_3] : memref<32x192xf32, #tpu.memory_space<vmem>>, vector<32x192xf32>
    "tpu.trace_start"() <{level = 10 : i32, message = "bre,ef->brf"}> : () -> ()
    %cst = arith.constant dense<0.000000e+00> : vector<2x8x192xf32>
    %2 = tpu.matmul %0, %1, %cst {dimension_numbers = #tpu.dot_dimension_numbers<[2], [0], [0, 1], [1], [0, 0, 0, 1, 1, 1], [], []>} : vector<2x8x32xf32>, vector<32x192xf32>, vector<2x8x192xf32> -> vector<2x8x192xf32>
    "tpu.trace_stop"() : () -> ()
    %3 = vector.extract_strided_slice %2 {offsets = [0, 0, 0], sizes = [2, 8, 64], strides = [1, 1, 1]} : vector<2x8x192xf32> to vector<2x8x64xf32>
    %4 = vector.extract_strided_slice %2 {offsets = [0, 0, 64], sizes = [2, 8, 64], strides = [1, 1, 1]} : vector<2x8x192xf32> to vector<2x8x64xf32>
    %5 = vector.extract_strided_slice %2 {offsets = [0, 0, 128], sizes = [2, 8, 64], strides = [1, 1, 1]} : vector<2x8x192xf32> to vector<2x8x64xf32>
    %c0_4 = arith.constant 0 : index
    %c0_5 = arith.constant 0 : index
    %6 = vector.load %arg3[%c0_4, %c0_5] : memref<64x32xf32, #tpu.memory_space<vmem>>, vector<64x32xf32>
    %c0_6 = arith.constant 0 : index
    %c0_7 = arith.constant 0 : index
    %7 = vector.load %arg4[%c0_6, %c0_7] : memref<1x32xf32, #tpu.memory_space<vmem>>, vector<1x32xf32>
    %8 = vector.extract_strided_slice %3 {offsets = [0, 0, 0], sizes = [2, 8, 16], strides = [1, 1, 1]} : vector<2x8x64xf32> to vector<2x8x16xf32>
    %9 = vector.extract_strided_slice %4 {offsets = [0, 0, 0], sizes = [2, 8, 16], strides = [1, 1, 1]} : vector<2x8x64xf32> to vector<2x8x16xf32>
    %10 = vector.extract_strided_slice %5 {offsets = [0, 0, 0], sizes = [2, 8, 16], strides = [1, 1, 1]} : vector<2x8x64xf32> to vector<2x8x16xf32>
    "tpu.trace_start"() <{level = 10 : i32, message = "bqd,bkd->bqk"}> : () -> ()
    %cst_8 = arith.constant dense<0.000000e+00> : vector<2x8x8xf32>
    %11 = tpu.matmul %8, %9, %cst_8 {dimension_numbers = #tpu.dot_dimension_numbers<[2], [2], [1], [1], [0, 0, 0, 1, 1, 1], [0], [0]>} : vector<2x8x16xf32>, vector<2x8x16xf32>, vector<2x8x8xf32> -> vector<2x8x8xf32>
    "tpu.trace_stop"() : () -> ()
    %cst_9 = arith.constant 2.500000e-01 : f32
    %12 = vector.broadcast %cst_9 : f32 to vector<2x8x8xf32>
    %13 = arith.mulf %11, %12 : vector<2x8x8xf32>
    %cst_10 = arith.constant dense<0xFF800000> : vector<2x8xf32>
    %14 = vector.multi_reduction <maximumf>, %13, %cst_10 [2] : vector<2x8x8xf32> to vector<2x8xf32>
    %15 = vector.shape_cast %14 : vector<2x8xf32> to vector<2x8x1xf32>
    %16 = vector.broadcast %15 : vector<2x8x1xf32> to vector<2x8x8xf32>
    %17 = arith.subf %13, %16 : vector<2x8x8xf32>
    %18 = math.exp %17 : vector<2x8x8xf32>
    %cst_11 = arith.constant dense<0.000000e+00> : vector<2x8xf32>
    %19 = vector.multi_reduction <add>, %18, %cst_11 [2] : vector<2x8x8xf32> to vector<2x8xf32>
    %20 = vector.shape_cast %19 : vector<2x8xf32> to vector<2x8x1xf32>
    %cst_12 = arith.constant 9.99999997E-7 : f32
    %21 = vector.broadcast %cst_12 : f32 to vector<2x8x1xf32>
    %22 = arith.addf %20, %21 : vector<2x8x1xf32>
    %23 = tpu.reciprocal %22 {approx = true} : vector<2x8x1xf32> -> vector<2x8x1xf32>
    %24 = vector.broadcast %23 : vector<2x8x1xf32> to vector<2x8x8xf32>
    %25 = arith.mulf %18, %24 : vector<2x8x8xf32>
    "tpu.trace_start"() <{level = 10 : i32, message = "bqk,bkd->bqd"}> : () -> ()
    %cst_13 = arith.constant dense<0.000000e+00> : vector<2x8x16xf32>
    %26 = tpu.matmul %25, %10, %cst_13 {dimension_numbers = #tpu.dot_dimension_numbers<[2], [1], [1], [2], [0, 0, 0, 1, 1, 2], [0], [0]>} : vector<2x8x8xf32>, vector<2x8x16xf32>, vector<2x8x16xf32> -> vector<2x8x16xf32>
    "tpu.trace_stop"() : () -> ()
    %27 = vector.extract_strided_slice %3 {offsets = [0, 0, 16], sizes = [2, 8, 16], strides = [1, 1, 1]} : vector<2x8x64xf32> to vector<2x8x16xf32>
    %28 = vector.extract_strided_slice %4 {offsets = [0, 0, 16], sizes = [2, 8, 16], strides = [1, 1, 1]} : vector<2x8x64xf32> to vector<2x8x16xf32>
    %29 = vector.extract_strided_slice %5 {offsets = [0, 0, 16], sizes = [2, 8, 16], strides = [1, 1, 1]} : vector<2x8x64xf32> to vector<2x8x16xf32>
    "tpu.trace_start"() <{level = 10 : i32, message = "bqd,bkd->bqk"}> : () -> ()
    %cst_14 = arith.constant dense<0.000000e+00> : vector<2x8x8xf32>
    %30 = tpu.matmul %27, %28, %cst_14 {dimension_numbers = #tpu.dot_dimension_numbers<[2], [2], [1], [1], [0, 0, 0, 1, 1, 1], [0], [0]>} : vector<2x8x16xf32>, vector<2x8x16xf32>, vector<2x8x8xf32> -> vector<2x8x8xf32>
    "tpu.trace_stop"() : () -> ()
    %cst_15 = arith.constant 2.500000e-01 : f32
    %31 = vector.broadcast %cst_15 : f32 to vector<2x8x8xf32>
    %32 = arith.mulf %30, %31 : vector<2x8x8xf32>
    %cst_16 = arith.constant dense<0xFF800000> : vector<2x8xf32>
    %33 = vector.multi_reduction <maximumf>, %32, %cst_16 [2] : vector<2x8x8xf32> to vector<2x8xf32>
    %34 = vector.shape_cast %33 : vector<2x8xf32> to vector<2x8x1xf32>
    %35 = vector.broadcast %34 : vector<2x8x1xf32> to vector<2x8x8xf32>
    %36 = arith.subf %32, %35 : vector<2x8x8xf32>
    %37 = math.exp %36 : vector<2x8x8xf32>
    %cst_17 = arith.constant dense<0.000000e+00> : vector<2x8xf32>
    %38 = vector.multi_reduction <add>, %37, %cst_17 [2] : vector<2x8x8xf32> to vector<2x8xf32>
    %39 = vector.shape_cast %38 : vector<2x8xf32> to vector<2x8x1xf32>
    %cst_18 = arith.constant 9.99999997E-7 : f32
    %40 = vector.broadcast %cst_18 : f32 to vector<2x8x1xf32>
    %41 = arith.addf %39, %40 : vector<2x8x1xf32>
    %42 = tpu.reciprocal %41 {approx = true} : vector<2x8x1xf32> -> vector<2x8x1xf32>
    %43 = vector.broadcast %42 : vector<2x8x1xf32> to vector<2x8x8xf32>
    %44 = arith.mulf %37, %43 : vector<2x8x8xf32>
    "tpu.trace_start"() <{level = 10 : i32, message = "bqk,bkd->bqd"}> : () -> ()
    %cst_19 = arith.constant dense<0.000000e+00> : vector<2x8x16xf32>
    %45 = tpu.matmul %44, %29, %cst_19 {dimension_numbers = #tpu.dot_dimension_numbers<[2], [1], [1], [2], [0, 0, 0, 1, 1, 2], [0], [0]>} : vector<2x8x8xf32>, vector<2x8x16xf32>, vector<2x8x16xf32> -> vector<2x8x16xf32>
    "tpu.trace_stop"() : () -> ()
    %46 = vector.extract_strided_slice %3 {offsets = [0, 0, 32], sizes = [2, 8, 16], strides = [1, 1, 1]} : vector<2x8x64xf32> to vector<2x8x16xf32>
    %47 = vector.extract_strided_slice %4 {offsets = [0, 0, 32], sizes = [2, 8, 16], strides = [1, 1, 1]} : vector<2x8x64xf32> to vector<2x8x16xf32>
    %48 = vector.extract_strided_slice %5 {offsets = [0, 0, 32], sizes = [2, 8, 16], strides = [1, 1, 1]} : vector<2x8x64xf32> to vector<2x8x16xf32>
    "tpu.trace_start"() <{level = 10 : i32, message = "bqd,bkd->bqk"}> : () -> ()
    %cst_20 = arith.constant dense<0.000000e+00> : vector<2x8x8xf32>
    %49 = tpu.matmul %46, %47, %cst_20 {dimension_numbers = #tpu.dot_dimension_numbers<[2], [2], [1], [1], [0, 0, 0, 1, 1, 1], [0], [0]>} : vector<2x8x16xf32>, vector<2x8x16xf32>, vector<2x8x8xf32> -> vector<2x8x8xf32>
    "tpu.trace_stop"() : () -> ()
    %cst_21 = arith.constant 2.500000e-01 : f32
    %50 = vector.broadcast %cst_21 : f32 to vector<2x8x8xf32>
    %51 = arith.mulf %49, %50 : vector<2x8x8xf32>
    %cst_22 = arith.constant dense<0xFF800000> : vector<2x8xf32>
    %52 = vector.multi_reduction <maximumf>, %51, %cst_22 [2] : vector<2x8x8xf32> to vector<2x8xf32>
    %53 = vector.shape_cast %52 : vector<2x8xf32> to vector<2x8x1xf32>
    %54 = vector.broadcast %53 : vector<2x8x1xf32> to vector<2x8x8xf32>
    %55 = arith.subf %51, %54 : vector<2x8x8xf32>
    %56 = math.exp %55 : vector<2x8x8xf32>
    %cst_23 = arith.constant dense<0.000000e+00> : vector<2x8xf32>
    %57 = vector.multi_reduction <add>, %56, %cst_23 [2] : vector<2x8x8xf32> to vector<2x8xf32>
    %58 = vector.shape_cast %57 : vector<2x8xf32> to vector<2x8x1xf32>
    %cst_24 = arith.constant 9.99999997E-7 : f32
    %59 = vector.broadcast %cst_24 : f32 to vector<2x8x1xf32>
    %60 = arith.addf %58, %59 : vector<2x8x1xf32>
    %61 = tpu.reciprocal %60 {approx = true} : vector<2x8x1xf32> -> vector<2x8x1xf32>
    %62 = vector.broadcast %61 : vector<2x8x1xf32> to vector<2x8x8xf32>
    %63 = arith.mulf %56, %62 : vector<2x8x8xf32>
    "tpu.trace_start"() <{level = 10 : i32, message = "bqk,bkd->bqd"}> : () -> ()
    %cst_25 = arith.constant dense<0.000000e+00> : vector<2x8x16xf32>
    %64 = tpu.matmul %63, %48, %cst_25 {dimension_numbers = #tpu.dot_dimension_numbers<[2], [1], [1], [2], [0, 0, 0, 1, 1, 2], [0], [0]>} : vector<2x8x8xf32>, vector<2x8x16xf32>, vector<2x8x16xf32> -> vector<2x8x16xf32>
    "tpu.trace_stop"() : () -> ()
    %65 = vector.extract_strided_slice %3 {offsets = [0, 0, 48], sizes = [2, 8, 16], strides = [1, 1, 1]} : vector<2x8x64xf32> to vector<2x8x16xf32>
    %66 = vector.extract_strided_slice %4 {offsets = [0, 0, 48], sizes = [2, 8, 16], strides = [1, 1, 1]} : vector<2x8x64xf32> to vector<2x8x16xf32>
    %67 = vector.extract_strided_slice %5 {offsets = [0, 0, 48], sizes = [2, 8, 16], strides = [1, 1, 1]} : vector<2x8x64xf32> to vector<2x8x16xf32>
    "tpu.trace_start"() <{level = 10 : i32, message = "bqd,bkd->bqk"}> : () -> ()
    %cst_26 = arith.constant dense<0.000000e+00> : vector<2x8x8xf32>
    %68 = tpu.matmul %65, %66, %cst_26 {dimension_numbers = #tpu.dot_dimension_numbers<[2], [2], [1], [1], [0, 0, 0, 1, 1, 1], [0], [0]>} : vector<2x8x16xf32>, vector<2x8x16xf32>, vector<2x8x8xf32> -> vector<2x8x8xf32>
    "tpu.trace_stop"() : () -> ()
    %cst_27 = arith.constant 2.500000e-01 : f32
    %69 = vector.broadcast %cst_27 : f32 to vector<2x8x8xf32>
    %70 = arith.mulf %68, %69 : vector<2x8x8xf32>
    %cst_28 = arith.constant dense<0xFF800000> : vector<2x8xf32>
    %71 = vector.multi_reduction <maximumf>, %70, %cst_28 [2] : vector<2x8x8xf32> to vector<2x8xf32>
    %72 = vector.shape_cast %71 : vector<2x8xf32> to vector<2x8x1xf32>
    %73 = vector.broadcast %72 : vector<2x8x1xf32> to vector<2x8x8xf32>
    %74 = arith.subf %70, %73 : vector<2x8x8xf32>
    %75 = math.exp %74 : vector<2x8x8xf32>
    %cst_29 = arith.constant dense<0.000000e+00> : vector<2x8xf32>
    %76 = vector.multi_reduction <add>, %75, %cst_29 [2] : vector<2x8x8xf32> to vector<2x8xf32>
    %77 = vector.shape_cast %76 : vector<2x8xf32> to vector<2x8x1xf32>
    %cst_30 = arith.constant 9.99999997E-7 : f32
    %78 = vector.broadcast %cst_30 : f32 to vector<2x8x1xf32>
    %79 = arith.addf %77, %78 : vector<2x8x1xf32>
    %80 = tpu.reciprocal %79 {approx = true} : vector<2x8x1xf32> -> vector<2x8x1xf32>
    %81 = vector.broadcast %80 : vector<2x8x1xf32> to vector<2x8x8xf32>
    %82 = arith.mulf %75, %81 : vector<2x8x8xf32>
    "tpu.trace_start"() <{level = 10 : i32, message = "bqk,bkd->bqd"}> : () -> ()
    %cst_31 = arith.constant dense<0.000000e+00> : vector<2x8x16xf32>
    %83 = tpu.matmul %82, %67, %cst_31 {dimension_numbers = #tpu.dot_dimension_numbers<[2], [1], [1], [2], [0, 0, 0, 1, 1, 2], [0], [0]>} : vector<2x8x8xf32>, vector<2x8x16xf32>, vector<2x8x16xf32> -> vector<2x8x16xf32>
    "tpu.trace_stop"() : () -> ()
    %84 = tpu.concatenate %26, %45, %64, %83 in 2 : vector<2x8x16xf32>, vector<2x8x16xf32>, vector<2x8x16xf32>, vector<2x8x16xf32> -> vector<2x8x64xf32>
    "tpu.trace_start"() <{level = 10 : i32, message = "bqf,fe->bqe"}> : () -> ()
    %cst_32 = arith.constant dense<0.000000e+00> : vector<2x8x32xf32>
    %85 = tpu.matmul %84, %6, %cst_32 {dimension_numbers = #tpu.dot_dimension_numbers<[2], [0], [0, 1], [1], [0, 0, 0, 1, 1, 1], [], []>} : vector<2x8x64xf32>, vector<64x32xf32>, vector<2x8x32xf32> -> vector<2x8x32xf32>
    "tpu.trace_stop"() : () -> ()
    %86 = vector.shape_cast %7 : vector<1x32xf32> to vector<1x1x32xf32>
    %87 = vector.broadcast %86 : vector<1x1x32xf32> to vector<2x8x32xf32>
    %88 = arith.addf %85, %87 : vector<2x8x32xf32>
    %c0_33 = arith.constant 0 : index
    %c0_34 = arith.constant 0 : index
    %c0_35 = arith.constant 0 : index
    %89 = vector.load %arg5[%c0_33, %c0_34, %c0_35] : memref<2x8x32xf32, #tpu.memory_space<vmem>>, vector<2x8x32xf32>
    tpu.vector_store %arg5[%c0_33, %c0_34, %c0_35], %88 {strides = array<i32>} : memref<2x8x32xf32, #tpu.memory_space<vmem>>, vector<2x8x32xf32>,
    return
  }
  func.func @transform_0(%arg0: i32) -> (i32, i32, i32) {
    %c0_i32 = arith.constant 0 : i32
    %c0_i32_0 = arith.constant 0 : i32
    %c0_i32_1 = arith.constant 0 : i32
    return %c0_i32, %arg0, %c0_i32_0 : i32, i32, i32
  }
  func.func @transform_1(%arg0: i32) -> (i32, i32) {
    %c0_i32 = arith.constant 0 : i32
    %c0_i32_0 = arith.constant 0 : i32
    %c0_i32_1 = arith.constant 0 : i32
    return %c0_i32, %c0_i32_0 : i32, i32
  }
  func.func @transform_2(%arg0: i32) -> (i32, i32) {
    %c0_i32 = arith.constant 0 : i32
    %c0_i32_0 = arith.constant 0 : i32
    %c0_i32_1 = arith.constant 0 : i32
    return %c0_i32, %c0_i32_0 : i32, i32
  }
  func.func @transform_3(%arg0: i32) -> (i32, i32) {
    %c0_i32 = arith.constant 0 : i32
    %c0_i32_0 = arith.constant 0 : i32
    %c0_i32_1 = arith.constant 0 : i32
    return %c0_i32, %c0_i32_0 : i32, i32
  }
  func.func @transform_4(%arg0: i32) -> (i32, i32, i32) {
    %c0_i32 = arith.constant 0 : i32
    %c0_i32_0 = arith.constant 0 : i32
    %c0_i32_1 = arith.constant 0 : i32
    return %c0_i32, %arg0, %c0_i32_0 : i32, i32, i32
  }
}

</mosaic_0001>

<llo_original>
// kernel: tpu_custom_call.1
$region0: #{tpu_custom_call.1}
  #allocation0 [shape = 'u32[]', space=smem, size = 0x4, offset = 0x4, fixed_abs, tag = 'smem constant byte address 0x4 - core index']
  #allocation1 [shape = 'u32[72,128]{1,0:T(1,128)}', space=vmem, size = 0x9000, scoped, tag = 'internal scratch']
  %s0 = inlined_call_operand.vmem [shape: f32[2,8,32], index: 0, kind: input, shape index: {}]
  %s1 = inlined_call_operand.vmem [shape: f32[32,192], index: 1, kind: input, shape index: {}]
  %s2 = inlined_call_operand.vmem [shape: f32[64,32], index: 2, kind: input, shape index: {}]
  %s3 = inlined_call_operand.vmem [shape: f32[1,32], index: 3, kind: input, shape index: {}]
  %s4 = inlined_call_operand.hbm [shape: f32[2,8,32], index: 4, kind: output, shape index: {}]
  %s5 = sld [smem:[#allocation0]]
  $region26: #{tpu_custom_call.1} parent=0
    _
  %s7 = ssub.s32 1, %s5
  %s8 = scalar_select 0, %s7, %s5
  $region1: #{tpu_custom_call.1} parent=0
    #allocation2 [shape = 'u8[8192]{0}', space=vmem, size = 0x2000, scoped, tag = 'output window, operand 0, single buffered']
    #allocation3 [shape = 's32[1]{0}', space=sflag, size = 0x4, scoped, tag = 'scoped memory for tpu_custom_call.1']
    %9 = vsyncpa [#allocation3], 0
    // Predicated region
    $region2: #{tpu_custom_call.1} parent=1 // pred_check
      _
    $region3: #{tpu_custom_call.1} parent=1 // pred_check_branch
      %11 = sbr.rel (0) target = $region5
    $region4: #{tpu_custom_call.1} parent=1 // pred_region
      _
    $region5: #{tpu_custom_call.1} parent=1 // pred_fallthru
      _
    // Predicated region
    $region6: #{tpu_custom_call.1} parent=1 // pred_check
      _
    $region7: #{tpu_custom_call.1} parent=1 // pred_check_branch
      %13 = sbr.rel (0) target = $region9
    $region8: #{tpu_custom_call.1} parent=1 // pred_region
      _
    $region9: #{tpu_custom_call.1} parent=1 // pred_fallthru
      _
    // Predicated region
    $region10: #{tpu_custom_call.1} parent=1 // pred_check
      _
    $region11: #{tpu_custom_call.1} parent=1 // pred_check_branch
      %15 = sbr.rel (0) target = $region13
    $region12: #{tpu_custom_call.1} parent=1 // pred_region
      _
    $region13: #{tpu_custom_call.1} parent=1 // pred_fallthru
      _
    // Predicated region
    $region14: #{tpu_custom_call.1} parent=1 // pred_check
      _
    $region15: #{tpu_custom_call.1} parent=1 // pred_check_branch
      %17 = sbr.rel (0) target = $region17
    $region16: #{tpu_custom_call.1} parent=1 // pred_region
      _
    $region17: #{tpu_custom_call.1} parent=1 // pred_fallthru
      _
    %v18 = vld [vmem:[%s0] sm:$0xff]
    %v19 = vld [vmem:[%s0 + $0x8] sm:$0xff]
    %v20 = vld [vmem:[%s1] sm:$0xff]
    %v21 = vld [vmem:[%s1 + $0x8] sm:$0xff]
    %v22 = vld [vmem:[%s1 + $0x10] sm:$0xff]
    %v23 = vld [vmem:[%s1 + $0x18] sm:$0xff]
    %v24 = vld [vmem:[%s1 + $0x20] sm:$0xff]
    %v25 = vld [vmem:[%s1 + $0x28] sm:$0xff]
    %v26 = vld [vmem:[%s1 + $0x30] sm:$0xff]
    %v27 = vld [vmem:[%s1 + $0x38] sm:$0xff]
    %vm28 = vcmask 261120
    %v30 = vsel %vm28, %v18, 0
    %v33 = vsel %vm28, %v19, 0
    %35 = vmatpush.msra.mxu0 0.0
    %36 = vmatpush.msra.mxu0 0.0
    %37 = vmatpush.msra.mxu0 0.0
    %38 = vmatpush.msra.mxu0 0.0
    %39 = vmatpush.msra.mxu0 0.0
    %40 = vmatpush.msra.mxu0 0.0
    %41 = vmatpush.msra.mxu0 0.0
    %42 = vmatpush.msra.mxu0 0.0
    %43 = vmatpush.msra.mxu0 0.0
    %44 = vmatpush.msra.mxu0 0.0
    %45 = vmatpush.msra.mxu0 0.0
    %46 = vmatpush.msra.mxu0 0.0
    %47 = vmatpush.msra.mxu0 %v26
    %48 = vmatpush.msra.mxu0 %v24
    %49 = vmatpush.msra.mxu0 %v22
    %50 = vmatpush.msra.mxu0 %v20
    %51 = vmatmul.f32.gmra.mxu0 %v30
    %v52 = vpop.f32.mrf.mxu0
    %v53 = vadd.f32 0.0, %v52
    %54 = vmatmul.f32.gmra.mxu0 %v33
    %v55 = vpop.f32.mrf.mxu0
    %v56 = vadd.f32 0.0, %v55
    %57 = vdwg.mxu0
    %58 = vmatpush.msra.mxu0 0.0
    %59 = vmatpush.msra.mxu0 0.0
    %60 = vmatpush.msra.mxu0 0.0
    %61 = vmatpush.msra.mxu0 0.0
    %62 = vmatpush.msra.mxu0 0.0
    %63 = vmatpush.msra.mxu0 0.0
    %64 = vmatpush.msra.mxu0 0.0
    %65 = vmatpush.msra.mxu0 0.0
    %66 = vmatpush.msra.mxu0 0.0
    %67 = vmatpush.msra.mxu0 0.0
    %68 = vmatpush.msra.mxu0 0.0
    %69 = vmatpush.msra.mxu0 0.0
    %70 = vmatpush.msra.mxu0 %v27
    %71 = vmatpush.msra.mxu0 %v25
    %72 = vmatpush.msra.mxu0 %v23
    %73 = vmatpush.msra.mxu0 %v21
    %74 = vmatmul.f32.gmra.mxu0 %v30
    %v75 = vpop.f32.mrf.mxu0
    %v76 = vadd.f32 0.0, %v75
    %77 = vmatmul.f32.gmra.mxu0 %v33
    %v78 = vpop.f32.mrf.mxu0
    %v79 = vadd.f32 0.0, %v78
    %80 = vdwg.mxu0
    %v81 = vld [vmem:[%s2] sm:$0xff]
    %v82 = vld [vmem:[%s2 + $0x8] sm:$0xff]
    %v83 = vld [vmem:[%s2 + $0x10] sm:$0xff]
    %v84 = vld [vmem:[%s2 + $0x18] sm:$0xff]
    %v85 = vld [vmem:[%s2 + $0x20] sm:$0xff]
    %v86 = vld [vmem:[%s2 + $0x28] sm:$0xff]
    %v87 = vld [vmem:[%s2 + $0x30] sm:$0xff]
    %v88 = vld [vmem:[%s2 + $0x38] sm:$0xff]
    %v89 = vld [vmem:[%s3] sm:$0x1]
    %91 = vrot.lane.b32.xlu0 %v53, 64
    %v92 = vpop.permute.xlu0 %91
    %vm93 = vcmask 130048
    %v94 = vsel %vm93, %v53, 0
    %v96 = vsel %vm93, %v92, 0
    %98 = vmatpush.xpose.msra.mxu0 0.0
    %99 = vmatpush.xpose.msra.mxu0 0.0
    %100 = vmatpush.xpose.msra.mxu0 0.0
    %101 = vmatpush.xpose.msra.mxu0 0.0
    %102 = vmatpush.xpose.msra.mxu0 0.0
    %103 = vmatpush.xpose.msra.mxu0 0.0
    %104 = vmatpush.xpose.msra.mxu0 0.0
    %105 = vmatpush.xpose.msra.mxu0 0.0
    %106 = vmatpush.xpose.msra.mxu0 0.0
    %107 = vmatpush.xpose.msra.mxu0 0.0
    %108 = vmatpush.xpose.msra.mxu0 0.0
    %109 = vmatpush.xpose.msra.mxu0 0.0
    %110 = vmatpush.xpose.msra.mxu0 0.0
    %111 = vmatpush.xpose.msra.mxu0 0.0
    %112 = vmatpush.xpose.msra.mxu0 0.0
    %113 = vmatpush.xpose.msra.mxu0 %v96
    %114 = vmatmul.f32.gmra.mxu0 %v94
    %v115 = vpop.f32.mrf.mxu0
    %v116 = vadd.f32 0.0, %v115
    %117 = vdwg.mxu0
    %119 = vrot.lane.b32.xlu0 %v56, 64
    %v120 = vpop.permute.xlu0 %119
    %v121 = vsel %vm93, %v56, 0
    %v123 = vsel %vm93, %v120, 0
    %125 = vmatpush.xpose.msra.mxu0 0.0
    %126 = vmatpush.xpose.msra.mxu0 0.0
    %127 = vmatpush.xpose.msra.mxu0 0.0
    %128 = vmatpush.xpose.msra.mxu0 0.0
    %129 = vmatpush.xpose.msra.mxu0 0.0
    %130 = vmatpush.xpose.msra.mxu0 0.0
    %131 = vmatpush.xpose.msra.mxu0 0.0
    %132 = vmatpush.xpose.msra.mxu0 0.0
    %133 = vmatpush.xpose.msra.mxu0 0.0
    %134 = vmatpush.xpose.msra.mxu0 0.0
    %135 = vmatpush.xpose.msra.mxu0 0.0
    %136 = vmatpush.xpose.msra.mxu0 0.0
    %137 = vmatpush.xpose.msra.mxu0 0.0
    %138 = vmatpush.xpose.msra.mxu0 0.0
    %139 = vmatpush.xpose.msra.mxu0 0.0
    %140 = vmatpush.xpose.msra.mxu0 %v123
    %141 = vmatmul.f32.gmra.mxu0 %v121
    %v142 = vpop.f32.mrf.mxu0
    %v143 = vadd.f32 0.0, %v142
    %144 = vdwg.mxu0
    %v145 = vmul.f32 %v116, 0.25
    %v146 = vmul.f32 %v143, 0.25
    %vm147 = vcmask 64512
    %v148 = vsel %vm147, %v145, -inf
    %149 = vmax.xlane.f32.xlu0 %v148
    %v150 = vpop.xlane.xlu0 %149
    %v151 = vsel %vm147, %v146, -inf
    %152 = vmax.xlane.f32.xlu0 %v151
    %v153 = vpop.xlane.xlu0 %152
    %v154 = vsub.f32 %v145, %v150
    %v155 = vsub.f32 %v146, %v153
    %v156 = vmul.f32 %v154, 1.442695
    %v157 = vpow.pop %v156
    %v158 = vmul.f32 %v155, 1.442695
    %v159 = vpow.pop %v158
    %v160 = vsel %vm147, %v157, 0.0
    %161 = vadd.xlane.f32.xlu0 %v160
    %v162 = vpop.xlane.xlu0 %161
    %v163 = vsel %vm147, %v159, 0.0
    %164 = vadd.xlane.f32.xlu0 %v163
    %v165 = vpop.xlane.xlu0 %164
    %v166 = vadd.f32 %v162, 1e-06
    %v167 = vadd.f32 %v165, 1e-06
    %v168 = vrcp.pop %v166
    %v169 = vrcp.pop %v167
    %v170 = vmul.f32 %v157, %v168
    %v171 = vmul.f32 %v159, %v169
    %v173 = vsel %vm147, %v170, 0
    %175 = vmatpush.msra.mxu0 0.0
    %176 = vmatpush.msra.mxu0 0.0
    %177 = vmatpush.msra.mxu0 0.0
    %178 = vmatpush.msra.mxu0 0.0
    %179 = vmatpush.msra.mxu0 0.0
    %180 = vmatpush.msra.mxu0 0.0
    %181 = vmatpush.msra.mxu0 0.0
    %182 = vmatpush.msra.mxu0 0.0
    %183 = vmatpush.msra.mxu0 0.0
    %184 = vmatpush.msra.mxu0 0.0
    %185 = vmatpush.msra.mxu0 0.0
    %186 = vmatpush.msra.mxu0 0.0
    %187 = vmatpush.msra.mxu0 0.0
    %188 = vmatpush.msra.mxu0 0.0
    %189 = vmatpush.msra.mxu0 0.0
    %190 = vmatpush.msra.mxu0 %v76
    %191 = vmatmul.f32.gmra.mxu0 %v173
    %v192 = vpop.f32.mrf.mxu0
    %v193 = vadd.f32 0.0, %v192
    %194 = vdwg.mxu0
    %v196 = vsel %vm147, %v171, 0
    %198 = vmatpush.msra.mxu0 0.0
    %199 = vmatpush.msra.mxu0 0.0
    %200 = vmatpush.msra.mxu0 0.0
    %201 = vmatpush.msra.mxu0 0.0
    %202 = vmatpush.msra.mxu0 0.0
    %203 = vmatpush.msra.mxu0 0.0
    %204 = vmatpush.msra.mxu0 0.0
    %205 = vmatpush.msra.mxu0 0.0
    %206 = vmatpush.msra.mxu0 0.0
    %207 = vmatpush.msra.mxu0 0.0
    %208 = vmatpush.msra.mxu0 0.0
    %209 = vmatpush.msra.mxu0 0.0
    %210 = vmatpush.msra.mxu0 0.0
    %211 = vmatpush.msra.mxu0 0.0
    %212 = vmatpush.msra.mxu0 0.0
    %213 = vmatpush.msra.mxu0 %v79
    %214 = vmatmul.f32.gmra.mxu0 %v196
    %v215 = vpop.f32.mrf.mxu0
    %v216 = vadd.f32 0.0, %v215
    %217 = vdwg.mxu0
    %218 = vrot.lane.b32.xlu0 %v53, 112
    %v219 = vpop.permute.xlu0 %218
    %220 = vrot.lane.b32.xlu0 %v53, 48
    %v221 = vpop.permute.xlu0 %220
    %v222 = vsel %vm93, %v219, 0
    %v224 = vsel %vm93, %v221, 0
    %226 = vmatpush.xpose.msra.mxu0 0.0
    %227 = vmatpush.xpose.msra.mxu0 0.0
    %228 = vmatpush.xpose.msra.mxu0 0.0
    %229 = vmatpush.xpose.msra.mxu0 0.0
    %230 = vmatpush.xpose.msra.mxu0 0.0
    %231 = vmatpush.xpose.msra.mxu0 0.0
    %232 = vmatpush.xpose.msra.mxu0 0.0
    %233 = vmatpush.xpose.msra.mxu0 0.0
    %234 = vmatpush.xpose.msra.mxu0 0.0
    %235 = vmatpush.xpose.msra.mxu0 0.0
    %236 = vmatpush.xpose.msra.mxu0 0.0
    %237 = vmatpush.xpose.msra.mxu0 0.0
    %238 = vmatpush.xpose.msra.mxu0 0.0
    %239 = vmatpush.xpose.msra.mxu0 0.0
    %240 = vmatpush.xpose.msra.mxu0 0.0
    %241 = vmatpush.xpose.msra.mxu0 %v224
    %242 = vmatmul.f32.gmra.mxu0 %v222
    %v243 = vpop.f32.mrf.mxu0
    %v244 = vadd.f32 0.0, %v243
    %245 = vdwg.mxu0
    %246 = vrot.lane.b32.xlu0 %v56, 112
    %v247 = vpop.permute.xlu0 %246
    %248 = vrot.lane.b32.xlu0 %v56, 48
    %v249 = vpop.permute.xlu0 %248
    %v250 = vsel %vm93, %v247, 0
    %v252 = vsel %vm93, %v249, 0
    %254 = vmatpush.xpose.msra.mxu0 0.0
    %255 = vmatpush.xpose.msra.mxu0 0.0
    %256 = vmatpush.xpose.msra.mxu0 0.0
    %257 = vmatpush.xpose.msra.mxu0 0.0
    %258 = vmatpush.xpose.msra.mxu0 0.0
    %259 = vmatpush.xpose.msra.mxu0 0.0
    %260 = vmatpush.xpose.msra.mxu0 0.0
    %261 = vmatpush.xpose.msra.mxu0 0.0
    %262 = vmatpush.xpose.msra.mxu0 0.0
    %263 = vmatpush.xpose.msra.mxu0 0.0
    %264 = vmatpush.xpose.msra.mxu0 0.0
    %265 = vmatpush.xpose.msra.mxu0 0.0
    %266 = vmatpush.xpose.msra.mxu0 0.0
    %267 = vmatpush.xpose.msra.mxu0 0.0
    %268 = vmatpush.xpose.msra.mxu0 0.0
    %269 = vmatpush.xpose.msra.mxu0 %v252
    %270 = vmatmul.f32.gmra.mxu0 %v250
    %v271 = vpop.f32.mrf.mxu0
    %v272 = vadd.f32 0.0, %v271
    %273 = vdwg.mxu0
    %v274 = vmul.f32 %v244, 0.25
    %v275 = vmul.f32 %v272, 0.25
    %v276 = vsel %vm147, %v274, -inf
    %277 = vmax.xlane.f32.xlu0 %v276
    %v278 = vpop.xlane.xlu0 %277
    %v279 = vsel %vm147, %v275, -inf
    %280 = vmax.xlane.f32.xlu0 %v279
    %v281 = vpop.xlane.xlu0 %280
    %v282 = vsub.f32 %v274, %v278
    %v283 = vsub.f32 %v275, %v281
    %v284 = vmul.f32 %v282, 1.442695
    %v285 = vpow.pop %v284
    %v286 = vmul.f32 %v283, 1.442695
    %v287 = vpow.pop %v286
    %v288 = vsel %vm147, %v285, 0.0
    %289 = vadd.xlane.f32.xlu0 %v288
    %v290 = vpop.xlane.xlu0 %289
    %v291 = vsel %vm147, %v287, 0.0
    %292 = vadd.xlane.f32.xlu0 %v291
    %v293 = vpop.xlane.xlu0 %292
    %v294 = vadd.f32 %v290, 1e-06
    %v295 = vadd.f32 %v293, 1e-06
    %v296 = vrcp.pop %v294
    %v297 = vrcp.pop %v295
    %v298 = vmul.f32 %v285, %v296
    %v299 = vmul.f32 %v287, %v297
    %301 = vrot.lane.b32.xlu0 %v76, 112
    %v302 = vpop.permute.xlu0 %301
    %v305 = vsel %vm147, %v298, 0
    %307 = vmatpush.msra.mxu0 0.0
    %308 = vmatpush.msra.mxu0 0.0
    %309 = vmatpush.msra.mxu0 0.0
    %310 = vmatpush.msra.mxu0 0.0
    %311 = vmatpush.msra.mxu0 0.0
    %312 = vmatpush.msra.mxu0 0.0
    %313 = vmatpush.msra.mxu0 0.0
    %314 = vmatpush.msra.mxu0 0.0
    %315 = vmatpush.msra.mxu0 0.0
    %316 = vmatpush.msra.mxu0 0.0
    %317 = vmatpush.msra.mxu0 0.0
    %318 = vmatpush.msra.mxu0 0.0
    %319 = vmatpush.msra.mxu0 0.0
    %320 = vmatpush.msra.mxu0 0.0
    %321 = vmatpush.msra.mxu0 0.0
    %322 = vmatpush.msra.mxu0 %v302
    %323 = vmatmul.f32.gmra.mxu0 %v305
    %v324 = vpop.f32.mrf.mxu0
    %v325 = vadd.f32 0.0, %v324
    %326 = vdwg.mxu0
    %328 = vrot.lane.b32.xlu0 %v79, 112
    %v329 = vpop.permute.xlu0 %328
    %v332 = vsel %vm147, %v299, 0
    %334 = vmatpush.msra.mxu0 0.0
    %335 = vmatpush.msra.mxu0 0.0
    %336 = vmatpush.msra.mxu0 0.0
    %337 = vmatpush.msra.mxu0 0.0
    %338 = vmatpush.msra.mxu0 0.0
    %339 = vmatpush.msra.mxu0 0.0
    %340 = vmatpush.msra.mxu0 0.0
    %341 = vmatpush.msra.mxu0 0.0
    %342 = vmatpush.msra.mxu0 0.0
    %343 = vmatpush.msra.mxu0 0.0
    %344 = vmatpush.msra.mxu0 0.0
    %345 = vmatpush.msra.mxu0 0.0
    %346 = vmatpush.msra.mxu0 0.0
    %347 = vmatpush.msra.mxu0 0.0
    %348 = vmatpush.msra.mxu0 0.0
    %349 = vmatpush.msra.mxu0 %v329
    %350 = vmatmul.f32.gmra.mxu0 %v332
    %v351 = vpop.f32.mrf.mxu0
    %v352 = vadd.f32 0.0, %v351
    %353 = vdwg.mxu0
    %354 = vrot.lane.b32.xlu0 %v53, 96
    %v355 = vpop.permute.xlu0 %354
    %356 = vrot.lane.b32.xlu0 %v53, 32
    %v357 = vpop.permute.xlu0 %356
    %v358 = vsel %vm93, %v355, 0
    %v360 = vsel %vm93, %v357, 0
    %362 = vmatpush.xpose.msra.mxu0 0.0
    %363 = vmatpush.xpose.msra.mxu0 0.0
    %364 = vmatpush.xpose.msra.mxu0 0.0
    %365 = vmatpush.xpose.msra.mxu0 0.0
    %366 = vmatpush.xpose.msra.mxu0 0.0
    %367 = vmatpush.xpose.msra.mxu0 0.0
    %368 = vmatpush.xpose.msra.mxu0 0.0
    %369 = vmatpush.xpose.msra.mxu0 0.0
    %370 = vmatpush.xpose.msra.mxu0 0.0
    %371 = vmatpush.xpose.msra.mxu0 0.0
    %372 = vmatpush.xpose.msra.mxu0 0.0
    %373 = vmatpush.xpose.msra.mxu0 0.0
    %374 = vmatpush.xpose.msra.mxu0 0.0
    %375 = vmatpush.xpose.msra.mxu0 0.0
    %376 = vmatpush.xpose.msra.mxu0 0.0
    %377 = vmatpush.xpose.msra.mxu0 %v360
    %378 = vmatmul.f32.gmra.mxu0 %v358
    %v379 = vpop.f32.mrf.mxu0
    %v380 = vadd.f32 0.0, %v379
    %381 = vdwg.mxu0
    %382 = vrot.lane.b32.xlu0 %v56, 96
    %v383 = vpop.permute.xlu0 %382
    %384 = vrot.lane.b32.xlu0 %v56, 32
    %v385 = vpop.permute.xlu0 %384
    %v386 = vsel %vm93, %v383, 0
    %v388 = vsel %vm93, %v385, 0
    %390 = vmatpush.xpose.msra.mxu0 0.0
    %391 = vmatpush.xpose.msra.mxu0 0.0
    %392 = vmatpush.xpose.msra.mxu0 0.0
    %393 = vmatpush.xpose.msra.mxu0 0.0
    %394 = vmatpush.xpose.msra.mxu0 0.0
    %395 = vmatpush.xpose.msra.mxu0 0.0
    %396 = vmatpush.xpose.msra.mxu0 0.0
    %397 = vmatpush.xpose.msra.mxu0 0.0
    %398 = vmatpush.xpose.msra.mxu0 0.0
    %399 = vmatpush.xpose.msra.mxu0 0.0
    %400 = vmatpush.xpose.msra.mxu0 0.0
    %401 = vmatpush.xpose.msra.mxu0 0.0
    %402 = vmatpush.xpose.msra.mxu0 0.0
    %403 = vmatpush.xpose.msra.mxu0 0.0
    %404 = vmatpush.xpose.msra.mxu0 0.0
    %405 = vmatpush.xpose.msra.mxu0 %v388
    %406 = vmatmul.f32.gmra.mxu0 %v386
    %v407 = vpop.f32.mrf.mxu0
    %v408 = vadd.f32 0.0, %v407
    %409 = vdwg.mxu0
    %v410 = vmul.f32 %v380, 0.25
    %v411 = vmul.f32 %v408, 0.25
    %v412 = vsel %vm147, %v410, -inf
    %413 = vmax.xlane.f32.xlu0 %v412
    %v414 = vpop.xlane.xlu0 %413
    %v415 = vsel %vm147, %v411, -inf
    %416 = vmax.xlane.f32.xlu0 %v415
    %v417 = vpop.xlane.xlu0 %416
    %v418 = vsub.f32 %v410, %v414
    %v419 = vsub.f32 %v411, %v417
    %v420 = vmul.f32 %v418, 1.442695
    %v421 = vpow.pop %v420
    %v422 = vmul.f32 %v419, 1.442695
    %v423 = vpow.pop %v422
    %v424 = vsel %vm147, %v421, 0.0
    %425 = vadd.xlane.f32.xlu0 %v424
    %v426 = vpop.xlane.xlu0 %425
    %v427 = vsel %vm147, %v423, 0.0
    %428 = vadd.xlane.f32.xlu0 %v427
    %v429 = vpop.xlane.xlu0 %428
    %v430 = vadd.f32 %v426, 1e-06
    %v431 = vadd.f32 %v429, 1e-06
    %v432 = vrcp.pop %v430
    %v433 = vrcp.pop %v431
    %v434 = vmul.f32 %v421, %v432
    %v435 = vmul.f32 %v423, %v433
    %436 = vrot.lane.b32.xlu0 %v76, 96
    %v437 = vpop.permute.xlu0 %436
    %v440 = vsel %vm147, %v434, 0
    %442 = vmatpush.msra.mxu0 0.0
    %443 = vmatpush.msra.mxu0 0.0
    %444 = vmatpush.msra.mxu0 0.0
    %445 = vmatpush.msra.mxu0 0.0
    %446 = vmatpush.msra.mxu0 0.0
    %447 = vmatpush.msra.mxu0 0.0
    %448 = vmatpush.msra.mxu0 0.0
    %449 = vmatpush.msra.mxu0 0.0
    %450 = vmatpush.msra.mxu0 0.0
    %451 = vmatpush.msra.mxu0 0.0
    %452 = vmatpush.msra.mxu0 0.0
    %453 = vmatpush.msra.mxu0 0.0
    %454 = vmatpush.msra.mxu0 0.0
    %455 = vmatpush.msra.mxu0 0.0
    %456 = vmatpush.msra.mxu0 0.0
    %457 = vmatpush.msra.mxu0 %v437
    %458 = vmatmul.f32.gmra.mxu0 %v440
    %v459 = vpop.f32.mrf.mxu0
    %v460 = vadd.f32 0.0, %v459
    %461 = vdwg.mxu0
    %462 = vrot.lane.b32.xlu0 %v79, 96
    %v463 = vpop.permute.xlu0 %462
    %v466 = vsel %vm147, %v435, 0
    %468 = vmatpush.msra.mxu0 0.0
    %469 = vmatpush.msra.mxu0 0.0
    %470 = vmatpush.msra.mxu0 0.0
    %471 = vmatpush.msra.mxu0 0.0
    %472 = vmatpush.msra.mxu0 0.0
    %473 = vmatpush.msra.mxu0 0.0
    %474 = vmatpush.msra.mxu0 0.0
    %475 = vmatpush.msra.mxu0 0.0
    %476 = vmatpush.msra.mxu0 0.0
    %477 = vmatpush.msra.mxu0 0.0
    %478 = vmatpush.msra.mxu0 0.0
    %479 = vmatpush.msra.mxu0 0.0
    %480 = vmatpush.msra.mxu0 0.0
    %481 = vmatpush.msra.mxu0 0.0
    %482 = vmatpush.msra.mxu0 0.0
    %483 = vmatpush.msra.mxu0 %v463
    %484 = vmatmul.f32.gmra.mxu0 %v466
    %v485 = vpop.f32.mrf.mxu0
    %v486 = vadd.f32 0.0, %v485
    %487 = vdwg.mxu0
    %488 = vrot.lane.b32.xlu0 %v53, 80
    %v489 = vpop.permute.xlu0 %488
    %490 = vrot.lane.b32.xlu0 %v53, 16
    %v491 = vpop.permute.xlu0 %490
    %v492 = vsel %vm93, %v489, 0
    %v494 = vsel %vm93, %v491, 0
    %496 = vmatpush.xpose.msra.mxu0 0.0
    %497 = vmatpush.xpose.msra.mxu0 0.0
    %498 = vmatpush.xpose.msra.mxu0 0.0
    %499 = vmatpush.xpose.msra.mxu0 0.0
    %500 = vmatpush.xpose.msra.mxu0 0.0
    %501 = vmatpush.xpose.msra.mxu0 0.0
    %502 = vmatpush.xpose.msra.mxu0 0.0
    %503 = vmatpush.xpose.msra.mxu0 0.0
    %504 = vmatpush.xpose.msra.mxu0 0.0
    %505 = vmatpush.xpose.msra.mxu0 0.0
    %506 = vmatpush.xpose.msra.mxu0 0.0
    %507 = vmatpush.xpose.msra.mxu0 0.0
    %508 = vmatpush.xpose.msra.mxu0 0.0
    %509 = vmatpush.xpose.msra.mxu0 0.0
    %510 = vmatpush.xpose.msra.mxu0 0.0
    %511 = vmatpush.xpose.msra.mxu0 %v494
    %512 = vmatmul.f32.gmra.mxu0 %v492
    %v513 = vpop.f32.mrf.mxu0
    %v514 = vadd.f32 0.0, %v513
    %515 = vdwg.mxu0
    %516 = vrot.lane.b32.xlu0 %v56, 80
    %v517 = vpop.permute.xlu0 %516
    %518 = vrot.lane.b32.xlu0 %v56, 16
    %v519 = vpop.permute.xlu0 %518
    %v520 = vsel %vm93, %v517, 0
    %v522 = vsel %vm93, %v519, 0
    %524 = vmatpush.xpose.msra.mxu0 0.0
    %525 = vmatpush.xpose.msra.mxu0 0.0
    %526 = vmatpush.xpose.msra.mxu0 0.0
    %527 = vmatpush.xpose.msra.mxu0 0.0
    %528 = vmatpush.xpose.msra.mxu0 0.0
    %529 = vmatpush.xpose.msra.mxu0 0.0
    %530 = vmatpush.xpose.msra.mxu0 0.0
    %531 = vmatpush.xpose.msra.mxu0 0.0
    %532 = vmatpush.xpose.msra.mxu0 0.0
    %533 = vmatpush.xpose.msra.mxu0 0.0
    %534 = vmatpush.xpose.msra.mxu0 0.0
    %535 = vmatpush.xpose.msra.mxu0 0.0
    %536 = vmatpush.xpose.msra.mxu0 0.0
    %537 = vmatpush.xpose.msra.mxu0 0.0
    %538 = vmatpush.xpose.msra.mxu0 0.0
    %539 = vmatpush.xpose.msra.mxu0 %v522
    %540 = vmatmul.f32.gmra.mxu0 %v520
    %v541 = vpop.f32.mrf.mxu0
    %v542 = vadd.f32 0.0, %v541
    %543 = vdwg.mxu0
    %v544 = vmul.f32 %v514, 0.25
    %v545 = vmul.f32 %v542, 0.25
    %v546 = vsel %vm147, %v544, -inf
    %547 = vmax.xlane.f32.xlu0 %v546
    %v548 = vpop.xlane.xlu0 %547
    %v549 = vsel %vm147, %v545, -inf
    %550 = vmax.xlane.f32.xlu0 %v549
    %v551 = vpop.xlane.xlu0 %550
    %v552 = vsub.f32 %v544, %v548
    %v553 = vsub.f32 %v545, %v551
    %v554 = vmul.f32 %v552, 1.442695
    %v555 = vpow.pop %v554
    %v556 = vmul.f32 %v553, 1.442695
    %v557 = vpow.pop %v556
    %v558 = vsel %vm147, %v555, 0.0
    %559 = vadd.xlane.f32.xlu0 %v558
    %v560 = vpop.xlane.xlu0 %559
    %v561 = vsel %vm147, %v557, 0.0
    %562 = vadd.xlane.f32.xlu0 %v561
    %v563 = vpop.xlane.xlu0 %562
    %v564 = vadd.f32 %v560, 1e-06
    %v565 = vadd.f32 %v563, 1e-06
    %v566 = vrcp.pop %v564
    %v567 = vrcp.pop %v565
    %v568 = vmul.f32 %v555, %v566
    %v569 = vmul.f32 %v557, %v567
    %570 = vrot.lane.b32.xlu0 %v76, 80
    %v571 = vpop.permute.xlu0 %570
    %v574 = vsel %vm147, %v568, 0
    %576 = vmatpush.msra.mxu0 0.0
    %577 = vmatpush.msra.mxu0 0.0
    %578 = vmatpush.msra.mxu0 0.0
    %579 = vmatpush.msra.mxu0 0.0
    %580 = vmatpush.msra.mxu0 0.0
    %581 = vmatpush.msra.mxu0 0.0
    %582 = vmatpush.msra.mxu0 0.0
    %583 = vmatpush.msra.mxu0 0.0
    %584 = vmatpush.msra.mxu0 0.0
    %585 = vmatpush.msra.mxu0 0.0
    %586 = vmatpush.msra.mxu0 0.0
    %587 = vmatpush.msra.mxu0 0.0
    %588 = vmatpush.msra.mxu0 0.0
    %589 = vmatpush.msra.mxu0 0.0
    %590 = vmatpush.msra.mxu0 0.0
    %591 = vmatpush.msra.mxu0 %v571
    %592 = vmatmul.f32.gmra.mxu0 %v574
    %v593 = vpop.f32.mrf.mxu0
    %v594 = vadd.f32 0.0, %v593
    %595 = vdwg.mxu0
    %596 = vrot.lane.b32.xlu0 %v79, 80
    %v597 = vpop.permute.xlu0 %596
    %v600 = vsel %vm147, %v569, 0
    %602 = vmatpush.msra.mxu0 0.0
    %603 = vmatpush.msra.mxu0 0.0
    %604 = vmatpush.msra.mxu0 0.0
    %605 = vmatpush.msra.mxu0 0.0
    %606 = vmatpush.msra.mxu0 0.0
    %607 = vmatpush.msra.mxu0 0.0
    %608 = vmatpush.msra.mxu0 0.0
    %609 = vmatpush.msra.mxu0 0.0
    %610 = vmatpush.msra.mxu0 0.0
    %611 = vmatpush.msra.mxu0 0.0
    %612 = vmatpush.msra.mxu0 0.0
    %613 = vmatpush.msra.mxu0 0.0
    %614 = vmatpush.msra.mxu0 0.0
    %615 = vmatpush.msra.mxu0 0.0
    %616 = vmatpush.msra.mxu0 0.0
    %617 = vmatpush.msra.mxu0 %v597
    %618 = vmatmul.f32.gmra.mxu0 %v600
    %v619 = vpop.f32.mrf.mxu0
    %v620 = vadd.f32 0.0, %v619
    %621 = vdwg.mxu0
    %624 = vrot.lane.b32.xlu0 %v325, 16
    %v625 = vpop.permute.xlu0 %624
    %626 = vrot.lane.b32.xlu0 %v352, 16
    %v627 = vpop.permute.xlu0 %626
    %632 = vrot.lane.b32.xlu0 %v460, 32
    %v633 = vpop.permute.xlu0 %632
    %634 = vrot.lane.b32.xlu0 %v486, 32
    %v635 = vpop.permute.xlu0 %634
    %640 = vrot.lane.b32.xlu0 %v594, 48
    %v641 = vpop.permute.xlu0 %640
    %642 = vrot.lane.b32.xlu0 %v620, 48
    %v643 = vpop.permute.xlu0 %642
    %v646 = vsel %vm93, %v193, %v625
    %v647 = vsel %vm93, %v216, %v627
    %v648 = vsel %vm28, %v646, %v633
    %v649 = vsel %vm28, %v647, %v635
    %vm650 = vcmask 392192
    %v651 = vsel %vm650, %v648, %v641
    %v652 = vsel %vm650, %v649, %v643
    %v654 = vperm.slane %v89, 0
    %vm656 = vcmask 523264
    %v658 = vsel %vm656, %v651, 0
    %v661 = vsel %vm656, %v652, 0
    %663 = vmatpush.msra.mxu0 0.0
    %664 = vmatpush.msra.mxu0 0.0
    %665 = vmatpush.msra.mxu0 0.0
    %666 = vmatpush.msra.mxu0 0.0
    %667 = vmatpush.msra.mxu0 0.0
    %668 = vmatpush.msra.mxu0 0.0
    %669 = vmatpush.msra.mxu0 0.0
    %670 = vmatpush.msra.mxu0 0.0
    %671 = vmatpush.msra.mxu0 %v88
    %672 = vmatpush.msra.mxu0 %v87
    %673 = vmatpush.msra.mxu0 %v86
    %674 = vmatpush.msra.mxu0 %v85
    %675 = vmatpush.msra.mxu0 %v84
    %676 = vmatpush.msra.mxu0 %v83
    %677 = vmatpush.msra.mxu0 %v82
    %678 = vmatpush.msra.mxu0 %v81
    %679 = vmatmul.f32.gmra.mxu0 %v658
    %v680 = vpop.f32.mrf.mxu0
    %v681 = vadd.f32 %v654, %v680
    %682 = vmatmul.f32.gmra.mxu0 %v661
    %v683 = vpop.f32.mrf.mxu0
    %v684 = vadd.f32 %v654, %v683
    %685 = vdwg.mxu0
    %686 = vst.msk [vmem:[#allocation2] sm:$0xff] %vm28, %v681
    %687 = vst.msk [vmem:[#allocation2 + $0x8] sm:$0xff] %vm28, %v684
    // Predicated region
    $region18: #{tpu_custom_call.1} parent=1 // pred_check
      _
    $region19: #{tpu_custom_call.1} parent=1 // pred_check_branch
      %689 = sbr.rel (0) target = $region21
    $region20: #{tpu_custom_call.1} parent=1 // pred_region
      %691 = vsyncadd [#allocation3], 0
      %s692 = sshll.u32 [#allocation2], 4
      %s693 = int_to_ptr.vmem [resolvable:$true] %s692
      %s694 = sshll.u32 %s4, 4
      %s695 = int_to_ptr.hbm [resolvable:$true] %s694
      %700 = dma.vmem_to_hbm [thread:$0]  %s693, 256, %s695, [#allocation3], 128, 128, 8
    $region21: #{tpu_custom_call.1} parent=1 // pred_fallthru
      _
    // Predicated region
    $region22: #{tpu_custom_call.1} parent=1 // pred_check
      _
    $region23: #{tpu_custom_call.1} parent=1 // pred_check_branch
      %702 = sbr.rel (0) target = $region25
    $region24: #{tpu_custom_call.1} parent=1 // pred_region
      %704 = dma.done [#allocation3], 256
    $region25: #{tpu_custom_call.1} parent=1 // pred_fallthru
      _
    %705 = vsyncpa [#allocation3], 1

</llo_original>
